<compile_context>
chip_gen: v6e
topology: v6e:2x2x1
jax: 0.10.0
libtpu: 0.0.40
codegen_flags: <defaults>
</compile_context>

<pallas_src>
import jax
import jax.numpy as jnp
from jax.experimental import pallas as pl
from jax.experimental.pallas import tpu as pltpu


def din_attention_kernel(q_ref, h_ref, w1q_ref, w1hx_ref, b1_ref,
                         w2_ref, b2_ref, o_ref):
    q = q_ref[...]                                   # (Bt, D)
    h = h_ref[...]                                   # (Bt, S, D)
    bt, s, d = h.shape

    # Row-flattened views for the (rows, 2D) x (2D, H) fused MXU matmul
    # (leading-dim collapse only; lane dim untouched).
    h2 = h.reshape(bt * s, d)                        # (Bt*S, D)
    qh2 = (q[:, None, :] * h).reshape(bt * s, d)     # (Bt*S, D)
    lhs = jnp.concatenate([h2, qh2], axis=-1)        # (Bt*S, 2D) lane-dense

    # First Linear with the (q - h) block folded into the q / h weights and
    # the h / q*h blocks stacked into one K=2D contraction:
    #   z1 = q @ w1_q' + [h | q*h] @ w1_hx + b1
    zq = jnp.dot(q, w1q_ref[...], preferred_element_type=jnp.float32)     # (Bt, H)
    zhx = jnp.dot(lhs, w1hx_ref[...], preferred_element_type=jnp.float32)  # (Bt*S, H)
    z1 = zhx.reshape(bt, s, -1) + zq[:, None, :] + b1_ref[...]            # (Bt, S, H)
    z1 = jnp.maximum(z1, 0.0)                                             # ReLU

    # Second Linear (H -> 1): VPU multiply + cross-lane sum (skip N=1 matmul).
    att = jnp.sum(z1 * w2_ref[...], axis=-1, keepdims=True) + b2_ref[...]  # (Bt, S, 1)

    # Attention-weighted sum over the sequence (sublane reduce per batch row).
    o_ref[...] = jnp.sum(att * h, axis=1).astype(o_ref.dtype)             # (Bt, D)


def _pick_batch_tile(batch, seq_len, emb_dim, itemsize,
                     history_tile_budget_bytes=4 << 20, min_grid_steps=2):
    """Batch tile picked by BYTES of the (Bt, S, D) history tile.

    - Largest multiple of 8 whose history tile fits ~history_tile_budget_bytes
      (big tiles amortize the ~0.35us/step overhead, per measured tile sweep).
    - Capped so the grid has >= min_grid_steps steps (v7x: 2 TensorCores share
      the "parallel" batch axis; also keeps the input pipeline overlapping).
    """
    bytes_per_batch_row = max(seq_len * emb_dim * itemsize, 1)
    bt = history_tile_budget_bytes // bytes_per_batch_row
    if batch >= 2 * 8:
        bt = min(bt, max(8, batch // min_grid_steps))
    bt = max(8, min(bt, max(batch, 8)))
    bt = (bt // 8) * 8                      # sublane-aligned batch tile
    return int(bt)


def din_attention(query_item, history_sequence, w1, b1, w2, b2,
                  *, block_b=None, vmem_limit_bytes=None, compute_dtype=None):
    B, S, D = history_sequence.shape
    H = w1.shape[1]
    assert query_item.shape == (B, D)
    assert w1.shape == (4 * D, H) and w2.shape == (H, 1)

    out_dtype = query_item.dtype
    if compute_dtype is None:
        # Optionally pass jnp.bfloat16 here to halve the dominant HBM traffic
        # (history stream) when numerics allow; matmuls still accumulate f32.
        compute_dtype = query_item.dtype

    # Fold the (q - h) weight block into the q / h blocks, and stack the
    # (folded) h block with the q*h block into one (2D, H) weight so the
    # per-history-row matmul is a single K=2D contraction.
    w1_q = (w1[:D] + w1[2 * D:3 * D]).astype(compute_dtype)              # (D, H)
    w1_hx = jnp.concatenate(
        [w1[D:2 * D] - w1[2 * D:3 * D], w1[3 * D:]], axis=0
    ).astype(compute_dtype)                                              # (2D, H)
    b1_row = b1.reshape(1, H).astype(jnp.float32)
    w2_row = w2.reshape(1, H).astype(jnp.float32)
    b2_s = b2.reshape(1, 1).astype(jnp.float32)

    q_in = query_item.astype(compute_dtype)
    h_in = history_sequence.astype(compute_dtype)
    itemsize = jnp.dtype(compute_dtype).itemsize

    if block_b is None:
        # TODO(synk): for very long histories (S*D*4 >> 4 MiB per batch row),
        # add an S grid axis (last, "arbitrary") with a VMEM f32 accumulator
        # instead of shrinking block_b below 8.
        block_b = _pick_batch_tile(B, S, D, itemsize)
    if vmem_limit_bytes is None:
        # Live VMEM ~ 6x the history tile (double-buffered inputs + lhs/z1
        # intermediates); 48 MiB is safe on v5e/v6e (128 MiB) and v7x (64 MiB).
        vmem_limit_bytes = 48 * 1024 * 1024

    # Pad the batch to a multiple of block_b (no silent tail drop).
    pB = pl.cdiv(B, block_b) * block_b
    if pB != B:
        pad = pB - B
        q_in = jnp.pad(q_in, ((0, pad), (0, 0)))
        h_in = jnp.pad(h_in, ((0, pad), (0, 0), (0, 0)))
    grid = (pB // block_b,)

    out = pl.pallas_call(
        din_attention_kernel,
        out_shape=jax.ShapeDtypeStruct((pB, D), out_dtype),
        grid_spec=pltpu.PrefetchScalarGridSpec(
            num_scalar_prefetch=0,
            grid=grid,
            in_specs=[
                pl.BlockSpec((block_b, D), lambda i: (i, 0)),        # query
                pl.BlockSpec((block_b, S, D), lambda i: (i, 0, 0)),  # history
                pl.BlockSpec((D, H), lambda i: (0, 0)),              # w1_q'
                pl.BlockSpec((2 * D, H), lambda i: (0, 0)),          # w1_hx
                pl.BlockSpec((1, H), lambda i: (0, 0)),              # b1
                pl.BlockSpec((1, H), lambda i: (0, 0)),              # w2 (row)
                pl.BlockSpec((1, 1), lambda i: (0, 0)),              # b2
            ],
            out_specs=pl.BlockSpec((block_b, D), lambda i: (i, 0)),
        ),
        compiler_params=pltpu.CompilerParams(
            dimension_semantics=("parallel",),   # batch tiles are independent
            vmem_limit_bytes=vmem_limit_bytes,
        ),
    )(q_in, h_in, w1_q, w1_hx, b1_row, w2_row, b2_s)

    return out[:B] if pB != B else out


def reference(query_item, history_sequence, w1, b1, w2, b2):
    B, S, D = history_sequence.shape
    q = jnp.broadcast_to(query_item[:, None, :], (B, S, D))
    x = jnp.concatenate(
        [q, history_sequence, q - history_sequence, q * history_sequence],
        axis=-1).reshape(B * S, 4 * D)
    z1 = jnp.maximum(x @ w1 + b1.reshape(1, -1), 0.0)
    att = (z1 @ w2 + b2.reshape(1, -1)).reshape(B, S)
    return (att[:, :, None] * history_sequence).sum(axis=1)


if __name__ == "__main__":
    # Small but grid-exercising shapes: batch=16 (auto-tiled as 2 x 8), seq=8,
    # embedding_dim=64, attention_units=[32].
    B, S, D, H = 16, 8, 64, 32
    key = jax.random.PRNGKey(0)
    k_q, k_h, k_w1, k_b1, k_w2, k_b2 = jax.random.split(key, 6)

    query = jax.random.normal(k_q, (B, D), dtype=jnp.float32)
    history = jax.random.normal(k_h, (B, S, D), dtype=jnp.float32)

    # Deterministic parameter init (PyTorch Linear-style uniform bounds).
    lim1 = 1.0 / jnp.sqrt(4.0 * D)
    w1 = jax.random.uniform(k_w1, (4 * D, H), jnp.float32, -lim1, lim1)
    b1 = jax.random.uniform(k_b1, (H,), jnp.float32, -lim1, lim1)
    lim2 = 1.0 / jnp.sqrt(float(H))
    w2 = jax.random.uniform(k_w2, (H, 1), jnp.float32, -lim2, lim2)
    b2 = jax.random.uniform(k_b2, (1,), jnp.float32, -lim2, lim2)

    # 1) Auto tile selection (block_b=8 -> grid=(2,)).
    out = din_attention(query, history, w1, b1, w2, b2)
    out = jax.block_until_ready(out)
    ref = reference(query, history, w1, b1, w2, b2)
    assert out.shape == (B, D)
    assert jnp.allclose(out, ref, atol=1e-4, rtol=1e-4), "mismatch vs reference"

    # 2) Non-divisible batch exercises the padding path (B=12, block_b=8).
    Bo = 12
    out2 = din_attention(query[:Bo], history[:Bo], w1, b1, w2, b2, block_b=8)
    out2 = jax.block_until_ready(out2)
    ref2 = reference(query[:Bo], history[:Bo], w1, b1, w2, b2)
    assert out2.shape == (Bo, D)
    assert jnp.allclose(out2, ref2, atol=1e-4, rtol=1e-4), "mismatch (padded tail)"

    print("KERNEL_OK")
</pallas_src>

<mosaic_0001>
module attributes {stable_mosaic.version = 11 : i64} {
  func.func @din_attention_kernel(%arg0: i32, %arg1: memref<8x64xf32, #tpu.memory_space<vmem>>, %arg2: memref<8x8x64xf32, #tpu.memory_space<vmem>>, %arg3: memref<64x32xf32, #tpu.memory_space<vmem>>, %arg4: memref<128x32xf32, #tpu.memory_space<vmem>>, %arg5: memref<1x32xf32, #tpu.memory_space<vmem>>, %arg6: memref<1x32xf32, #tpu.memory_space<vmem>>, %arg7: memref<1x1xf32, #tpu.memory_space<vmem>>, %arg8: memref<8x64xf32, #tpu.memory_space<vmem>>) attributes {dimension_semantics = [#tpu.dimension_semantics<parallel>], iteration_bounds = array<i64: 2>, scalar_prefetch = 0 : i64, scratch_operands = 0 : i64, tpu.core_type = #tpu.core_type<tc>, window_params = [{transform_indices = @transform_0, window_bounds = array<i64: 8, 64>}, {transform_indices = @transform_1, window_bounds = array<i64: 8, 8, 64>}, {pipeline_mode = #tpu.pipeline_mode<synchronous>, transform_indices = @transform_2, window_bounds = array<i64: 64, 32>}, {pipeline_mode = #tpu.pipeline_mode<synchronous>, transform_indices = @transform_3, window_bounds = array<i64: 128, 32>}, {pipeline_mode = #tpu.pipeline_mode<synchronous>, transform_indices = @transform_4, window_bounds = array<i64: 1, 32>}, {pipeline_mode = #tpu.pipeline_mode<synchronous>, transform_indices = @transform_5, window_bounds = array<i64: 1, 32>}, {pipeline_mode = #tpu.pipeline_mode<synchronous>, transform_indices = @transform_6, window_bounds = array<i64: 1, 1>}, {transform_indices = @transform_7, window_bounds = array<i64: 8, 64>}]} {
    %c0 = arith.constant 0 : index
    %c0_0 = arith.constant 0 : index
    %0 = vector.load %arg1[%c0, %c0_0] : memref<8x64xf32, #tpu.memory_space<vmem>>, vector<8x64xf32>
    %c0_1 = arith.constant 0 : index
    %c0_2 = arith.constant 0 : index
    %c0_3 = arith.constant 0 : index
    %1 = vector.load %arg2[%c0_1, %c0_2, %c0_3] : memref<8x8x64xf32, #tpu.memory_space<vmem>>, vector<8x8x64xf32>
    %2 = vector.shape_cast %1 : vector<8x8x64xf32> to vector<64x64xf32>
    %3 = vector.shape_cast %0 : vector<8x64xf32> to vector<8x1x64xf32>
    %4 = vector.broadcast %3 : vector<8x1x64xf32> to vector<8x8x64xf32>
    %5 = arith.mulf %4, %1 : vector<8x8x64xf32>
    %6 = vector.shape_cast %5 : vector<8x8x64xf32> to vector<64x64xf32>
    %7 = tpu.concatenate %2, %6 in 1 : vector<64x64xf32>, vector<64x64xf32> -> vector<64x128xf32>
    %c0_4 = arith.constant 0 : index
    %c0_5 = arith.constant 0 : index
    %8 = vector.load %arg3[%c0_4, %c0_5] : memref<64x32xf32, #tpu.memory_space<vmem>>, vector<64x32xf32>
    %cst = arith.constant dense<0.000000e+00> : vector<8x32xf32>
    %9 = tpu.matmul %0, %8, %cst {dimension_numbers = #tpu.dot_dimension_numbers<[1], [0], [0], [1], [0, 0, 1, 1], [], []>} : vector<8x64xf32>, vector<64x32xf32>, vector<8x32xf32> -> vector<8x32xf32>
    %c0_6 = arith.constant 0 : index
    %c0_7 = arith.constant 0 : index
    %10 = vector.load %arg4[%c0_6, %c0_7] : memref<128x32xf32, #tpu.memory_space<vmem>>, vector<128x32xf32>
    %cst_8 = arith.constant dense<0.000000e+00> : vector<64x32xf32>
    %11 = tpu.matmul %7, %10, %cst_8 {dimension_numbers = #tpu.dot_dimension_numbers<[1], [0], [0], [1], [0, 0, 1, 1], [], []>} : vector<64x128xf32>, vector<128x32xf32>, vector<64x32xf32> -> vector<64x32xf32>
    %12 = vector.shape_cast %11 : vector<64x32xf32> to vector<8x8x32xf32>
    %13 = vector.shape_cast %9 : vector<8x32xf32> to vector<8x1x32xf32>
    %14 = vector.broadcast %13 : vector<8x1x32xf32> to vector<8x8x32xf32>
    %15 = arith.addf %12, %14 : vector<8x8x32xf32>
    %c0_9 = arith.constant 0 : index
    %c0_10 = arith.constant 0 : index
    %16 = vector.load %arg5[%c0_9, %c0_10] : memref<1x32xf32, #tpu.memory_space<vmem>>, vector<1x32xf32>
    %17 = vector.shape_cast %16 : vector<1x32xf32> to vector<1x1x32xf32>
    %18 = vector.broadcast %17 : vector<1x1x32xf32> to vector<8x8x32xf32>
    %19 = arith.addf %15, %18 : vector<8x8x32xf32>
    %cst_11 = arith.constant 0.000000e+00 : f32
    %20 = vector.broadcast %cst_11 : f32 to vector<8x8x32xf32>
    %21 = arith.maximumf %19, %20 : vector<8x8x32xf32>
    %c0_12 = arith.constant 0 : index
    %c0_13 = arith.constant 0 : index
    %22 = vector.load %arg6[%c0_12, %c0_13] : memref<1x32xf32, #tpu.memory_space<vmem>>, vector<1x32xf32>
    %23 = vector.shape_cast %22 : vector<1x32xf32> to vector<1x1x32xf32>
    %24 = vector.broadcast %23 : vector<1x1x32xf32> to vector<8x8x32xf32>
    %25 = arith.mulf %21, %24 : vector<8x8x32xf32>
    %cst_14 = arith.constant dense<0.000000e+00> : vector<8x8xf32>
    %26 = vector.multi_reduction <add>, %25, %cst_14 [2] : vector<8x8x32xf32> to vector<8x8xf32>
    %27 = vector.shape_cast %26 : vector<8x8xf32> to vector<8x8x1xf32>
    %c0_15 = arith.constant 0 : index
    %c0_16 = arith.constant 0 : index
    %28 = vector.load %arg7[%c0_15, %c0_16] : memref<1x1xf32, #tpu.memory_space<vmem>>, vector<1x1xf32>
    %29 = vector.shape_cast %28 : vector<1x1xf32> to vector<1x1x1xf32>
    %30 = vector.broadcast %29 : vector<1x1x1xf32> to vector<8x8x1xf32>
    %31 = arith.addf %27, %30 : vector<8x8x1xf32>
    %32 = vector.broadcast %31 : vector<8x8x1xf32> to vector<8x8x64xf32>
    %33 = arith.mulf %32, %1 : vector<8x8x64xf32>
    %cst_17 = arith.constant dense<0.000000e+00> : vector<8x64xf32>
    %34 = vector.multi_reduction <add>, %33, %cst_17 [1] : vector<8x8x64xf32> to vector<8x64xf32>
    %c0_18 = arith.constant 0 : index
    %c0_19 = arith.constant 0 : index
    %35 = vector.load %arg8[%c0_18, %c0_19] : memref<8x64xf32, #tpu.memory_space<vmem>>, vector<8x64xf32>
    tpu.vector_store %arg8[%c0_18, %c0_19], %34 {strides = array<i32>} : memref<8x64xf32, #tpu.memory_space<vmem>>, vector<8x64xf32>,
    return
  }
  func.func @transform_0(%arg0: i32) -> (i32, i32) {
    %c0_i32 = arith.constant 0 : i32
    %c0_i32_0 = arith.constant 0 : i32
    return %arg0, %c0_i32 : i32, i32
  }
  func.func @transform_1(%arg0: i32) -> (i32, i32, i32) {
    %c0_i32 = arith.constant 0 : i32
    %c0_i32_0 = arith.constant 0 : i32
    %c0_i32_1 = arith.constant 0 : i32
    return %arg0, %c0_i32, %c0_i32_0 : i32, i32, i32
  }
  func.func @transform_2(%arg0: i32) -> (i32, i32) {
    %c0_i32 = arith.constant 0 : i32
    %c0_i32_0 = arith.constant 0 : i32
    %c0_i32_1 = arith.constant 0 : i32
    return %c0_i32, %c0_i32_0 : i32, i32
  }
  func.func @transform_3(%arg0: i32) -> (i32, i32) {
    %c0_i32 = arith.constant 0 : i32
    %c0_i32_0 = arith.constant 0 : i32
    %c0_i32_1 = arith.constant 0 : i32
    return %c0_i32, %c0_i32_0 : i32, i32
  }
  func.func @transform_4(%arg0: i32) -> (i32, i32) {
    %c0_i32 = arith.constant 0 : i32
    %c0_i32_0 = arith.constant 0 : i32
    %c0_i32_1 = arith.constant 0 : i32
    return %c0_i32, %c0_i32_0 : i32, i32
  }
  func.func @transform_5(%arg0: i32) -> (i32, i32) {
    %c0_i32 = arith.constant 0 : i32
    %c0_i32_0 = arith.constant 0 : i32
    %c0_i32_1 = arith.constant 0 : i32
    return %c0_i32, %c0_i32_0 : i32, i32
  }
  func.func @transform_6(%arg0: i32) -> (i32, i32) {
    %c0_i32 = arith.constant 0 : i32
    %c0_i32_0 = arith.constant 0 : i32
    %c0_i32_1 = arith.constant 0 : i32
    return %c0_i32, %c0_i32_0 : i32, i32
  }
  func.func @transform_7(%arg0: i32) -> (i32, i32) {
    %c0_i32 = arith.constant 0 : i32
    %c0_i32_0 = arith.constant 0 : i32
    return %arg0, %c0_i32 : i32, i32
  }
}

</mosaic_0001>

<llo_original>
// kernel: tpu_custom_call.1
$region0: #{tpu_custom_call.1}
  #allocation0 [shape = 'u32[]', space=smem, size = 0x4, offset = 0x4, fixed_abs, tag = 'smem constant byte address 0x4 - core index']
  #allocation1 [shape = 'u32[144,128]{1,0:T(1,128)}', space=vmem, size = 0x12000, scoped, tag = 'internal scratch']
  #allocation2 [shape = 'f32[1,1]{1,0:T(1,128)S(1)}', space=vmem, size = 0x200, scoped, tag = 'scoped memory for tpu_custom_call.1']
  %s0 = inlined_call_operand.vmem [shape: f32[16,64], index: 0, kind: input, shape index: {}]
  %s1 = inlined_call_operand.vmem [shape: f32[16,8,64], index: 1, kind: input, shape index: {}]
  %s2 = inlined_call_operand.vmem [shape: f32[64,32], index: 2, kind: input, shape index: {}]
  %s3 = inlined_call_operand.vmem [shape: f32[128,32], index: 3, kind: input, shape index: {}]
  %s4 = inlined_call_operand.vmem [shape: f32[1,32], index: 4, kind: input, shape index: {}]
  %s5 = inlined_call_operand.vmem [shape: f32[1,32], index: 5, kind: input, shape index: {}]
  %s6 = inlined_call_operand.<no memory space> [shape: f32[1,1], index: 6, kind: input, shape index: {}]
  %s7 = inlined_call_operand.hbm [shape: f32[16,64], index: 7, kind: output, shape index: {}]
  %s8 = sld [smem:[#allocation0]]
  $region61: #{tpu_custom_call.1} parent=0
    _
  %s10 = ssub.s32 1, %s8
  %s11 = scalar_select 0, %s10, %s8
  %v12 = vstv %s6
  %13 = vst [vmem:[#allocation2] sm:$0x1] %v12
  $region1: #{tpu_custom_call.1} parent=0
    #allocation3 [shape = 'u8[8192]{0}', space=vmem, size = 0x2000, scoped, tag = 'output window, operand 0']
    #allocation4 [shape = 's32[2]{0}', space=sflag, size = 0x8, scoped, tag = 'scoped memory for tpu_custom_call.1']
    %14 = vsyncpa [#allocation4], 0
    %s15 = scalar_lea.sflag [#allocation4], 1
    %16 = vsyncpa %s15, 0
    loop: start=0, step=1, limit=4
    $region2: #{tpu_custom_call.1} parent=1 // loop_pre_header
      _
    $region3: #{tpu_custom_call.1} parent=1 // loop_header
      %s18 = sphi 0, %s22
      %p19 = scmp.ge.s32.totalorder %s18, 4
      %s28 = sphi 0, %s30
      %s31 = sphi 0, %s28
      %s32 = sphi 0, %s31
      %s48 = sphi 0, %s32
      %s54 = sphi 0, %s56
      %s57 = sphi 0, %s54
      %s58 = sphi 0, %s57
      %s74 = sphi 0, %s58
      %s78 = sphi 0, %s78
      %s80 = sphi 0, %s78
      %s81 = sphi 0, %s80
      %s95 = sphi 0, %s81
      %s99 = sphi 0, %s99
      %s101 = sphi 0, %s99
      %s102 = sphi 0, %s101
      %s116 = sphi 0, %s102
      %s120 = sphi 0, %s120
      %s122 = sphi 0, %s120
      %s123 = sphi 0, %s122
      %s137 = sphi 0, %s123
      %s141 = sphi 0, %s141
      %s143 = sphi 0, %s141
      %s144 = sphi 0, %s143
      %s158 = sphi 0, %s144
      %s162 = sphi 0, %s162
      %s164 = sphi 0, %s162
      %s165 = sphi 0, %s164
      %s179 = sphi 0, %s165
      %s185 = sphi 0, %s187
      %s188 = sphi 0, %s185
      %s189 = sphi 0, %s188
      %s205 = sphi 0, %s189
    $region4: #{tpu_custom_call.1} parent=1 // loop_header_branch
      %21 = sbr.rel (%p19) target = $region8
    $region5: #{tpu_custom_call.1} parent=1 // loop_body
      %s23 = ssub.s32 %s18, 1
      %s24 = ssub.s32 %s18, 2
      %s25 = sadd.s32 %s18, 1
      %s26 = ssub.s32 %s18, %s25
      %p27 = scmp.eq.s32.totalorder %s26, 0
      %s29 = sadd.s32 %s28, 1
      %s30 = scalar_select %p27, %s28, %s29
      %p33 = pneg %p27
      %p34 = scmp.eq.s32.totalorder %s18, 1
      %p35 = por %p33, %p34
      %p36 = scmp.ne.s32.totalorder %s28, %s31
      %p37 = scmp.eq.s32.totalorder %s18, 0
      %p38 = por %p36, %p37
      %p39 = scmp.ne.s32.totalorder %s28, %s31
      %p40 = scmp.eq.s32.totalorder %s23, 1
      %p41 = por %p39, %p40
      %p42 = scmp.ne.s32.totalorder %s31, %s32
      %p43 = scmp.eq.s32.totalorder %s23, 0
      %p44 = por %p42, %p43
      %p45 = scmp.ne.s32.totalorder %s31, %s32
      %p46 = scmp.eq.s32.totalorder %s24, 1
      %p47 = por %p45, %p46
      %p49 = scmp.ne.s32.totalorder %s32, %s48
      %p50 = scmp.eq.s32.totalorder %s24, 0
      %p51 = por %p49, %p50
      %s52 = ssub.s32 %s18, %s25
      %p53 = scmp.eq.s32.totalorder %s52, 0
      %s55 = sadd.s32 %s54, 1
      %s56 = scalar_select %p53, %s54, %s55
      %p59 = pneg %p53
      %p60 = scmp.eq.s32.totalorder %s18, 1
      %p61 = por %p59, %p60
      %p62 = scmp.ne.s32.totalorder %s54, %s57
      %p63 = scmp.eq.s32.totalorder %s18, 0
      %p64 = por %p62, %p63
      %p65 = scmp.ne.s32.totalorder %s54, %s57
      %p66 = scmp.eq.s32.totalorder %s23, 1
      %p67 = por %p65, %p66
      %p68 = scmp.ne.s32.totalorder %s57, %s58
      %p69 = scmp.eq.s32.totalorder %s23, 0
      %p70 = por %p68, %p69
      %p71 = scmp.ne.s32.totalorder %s57, %s58
      %p72 = scmp.eq.s32.totalorder %s24, 1
      %p73 = por %p71, %p72
      %p75 = scmp.ne.s32.totalorder %s58, %s74
      %p76 = scmp.eq.s32.totalorder %s24, 0
      %p77 = por %p75, %p76
      %s79 = sadd.s32 %s78, 1
      %p82 = scmp.eq.s32.totalorder %s18, 1
      %p83 = scmp.ne.s32.totalorder %s78, %s80
      %p84 = scmp.eq.s32.totalorder %s18, 0
      %p85 = por %p83, %p84
      %p86 = scmp.ne.s32.totalorder %s78, %s80
      %p87 = scmp.eq.s32.totalorder %s23, 1
      %p88 = por %p86, %p87
      %p89 = scmp.ne.s32.totalorder %s80, %s81
      %p90 = scmp.eq.s32.totalorder %s23, 0
      %p91 = por %p89, %p90
      %p92 = scmp.ne.s32.totalorder %s80, %s81
      %p93 = scmp.eq.s32.totalorder %s24, 1
      %p94 = por %p92, %p93
      %p96 = scmp.ne.s32.totalorder %s81, %s95
      %p97 = scmp.eq.s32.totalorder %s24, 0
      %p98 = por %p96, %p97
      %s100 = sadd.s32 %s99, 1
      %p103 = scmp.eq.s32.totalorder %s18, 1
      %p104 = scmp.ne.s32.totalorder %s99, %s101
      %p105 = scmp.eq.s32.totalorder %s18, 0
      %p106 = por %p104, %p105
      %p107 = scmp.ne.s32.totalorder %s99, %s101
      %p108 = scmp.eq.s32.totalorder %s23, 1
      %p109 = por %p107, %p108
      %p110 = scmp.ne.s32.totalorder %s101, %s102
      %p111 = scmp.eq.s32.totalorder %s23, 0
      %p112 = por %p110, %p111
      %p113 = scmp.ne.s32.totalorder %s101, %s102
      %p114 = scmp.eq.s32.totalorder %s24, 1
      %p115 = por %p113, %p114
      %p117 = scmp.ne.s32.totalorder %s102, %s116
      %p118 = scmp.eq.s32.totalorder %s24, 0
      %p119 = por %p117, %p118
      %s121 = sadd.s32 %s120, 1
      %p124 = scmp.eq.s32.totalorder %s18, 1
      %p125 = scmp.ne.s32.totalorder %s120, %s122
      %p126 = scmp.eq.s32.totalorder %s18, 0
      %p127 = por %p125, %p126
      %p128 = scmp.ne.s32.totalorder %s120, %s122
      %p129 = scmp.eq.s32.totalorder %s23, 1
      %p130 = por %p128, %p129
      %p131 = scmp.ne.s32.totalorder %s122, %s123
      %p132 = scmp.eq.s32.totalorder %s23, 0
      %p133 = por %p131, %p132
      %p134 = scmp.ne.s32.totalorder %s122, %s123
      %p135 = scmp.eq.s32.totalorder %s24, 1
      %p136 = por %p134, %p135
      %p138 = scmp.ne.s32.totalorder %s123, %s137
      %p139 = scmp.eq.s32.totalorder %s24, 0
      %p140 = por %p138, %p139
      %s142 = sadd.s32 %s141, 1
      %p145 = scmp.eq.s32.totalorder %s18, 1
      %p146 = scmp.ne.s32.totalorder %s141, %s143
      %p147 = scmp.eq.s32.totalorder %s18, 0
      %p148 = por %p146, %p147
      %p149 = scmp.ne.s32.totalorder %s141, %s143
      %p150 = scmp.eq.s32.totalorder %s23, 1
      %p151 = por %p149, %p150
      %p152 = scmp.ne.s32.totalorder %s143, %s144
      %p153 = scmp.eq.s32.totalorder %s23, 0
      %p154 = por %p152, %p153
      %p155 = scmp.ne.s32.totalorder %s143, %s144
      %p156 = scmp.eq.s32.totalorder %s24, 1
      %p157 = por %p155, %p156
      %p159 = scmp.ne.s32.totalorder %s144, %s158
      %p160 = scmp.eq.s32.totalorder %s24, 0
      %p161 = por %p159, %p160
      %s163 = sadd.s32 %s162, 1
      %p166 = scmp.eq.s32.totalorder %s18, 1
      %p167 = scmp.ne.s32.totalorder %s162, %s164
      %p168 = scmp.eq.s32.totalorder %s18, 0
      %p169 = por %p167, %p168
      %p170 = scmp.ne.s32.totalorder %s162, %s164
      %p171 = scmp.eq.s32.totalorder %s23, 1
      %p172 = por %p170, %p171
      %p173 = scmp.ne.s32.totalorder %s164, %s165
      %p174 = scmp.eq.s32.totalorder %s23, 0
      %p175 = por %p173, %p174
      %p176 = scmp.ne.s32.totalorder %s164, %s165
      %p177 = scmp.eq.s32.totalorder %s24, 1
      %p178 = por %p176, %p177
      %p180 = scmp.ne.s32.totalorder %s165, %s179
      %p181 = scmp.eq.s32.totalorder %s24, 0
      %p182 = por %p180, %p181
      %s183 = ssub.s32 %s18, %s25
      %p184 = scmp.eq.s32.totalorder %s183, 0
      %s186 = sadd.s32 %s185, 1
      %s187 = scalar_select %p184, %s185, %s186
      %p190 = pneg %p184
      %p191 = scmp.eq.s32.totalorder %s18, 1
      %p192 = por %p190, %p191
      %p193 = scmp.ne.s32.totalorder %s185, %s188
      %p194 = scmp.eq.s32.totalorder %s18, 0
      %p195 = por %p193, %p194
      %p196 = scmp.ne.s32.totalorder %s185, %s188
      %p197 = scmp.eq.s32.totalorder %s23, 1
      %p198 = por %p196, %p197
      %p199 = scmp.ne.s32.totalorder %s188, %s189
      %p200 = scmp.eq.s32.totalorder %s23, 0
      %p201 = por %p199, %p200
      %p202 = scmp.ne.s32.totalorder %s188, %s189
      %p203 = scmp.eq.s32.totalorder %s24, 1
      %p204 = por %p202, %p203
      %p206 = scmp.ne.s32.totalorder %s189, %s205
      %p207 = scmp.eq.s32.totalorder %s24, 0
      %p208 = por %p206, %p207
      %p209 = scmp.le.s32.totalorder 1, %s18
      %p210 = scmp.lt.s32.totalorder %s18, 3
      %p211 = pnand %p209, %p210
      %p212 = pneg %p211
      // Predicated region
      $region9: #{tpu_custom_call.1} parent=5 // pred_check
        _
      $region10: #{tpu_custom_call.1} parent=5 // pred_check_branch
        %214 = sbr.rel (%p211) target = $region12
      $region11: #{tpu_custom_call.1} parent=5 // pred_region
        %s215 = ssub.s32 %s18, 1
        // Predicated region
        $region13: #{tpu_custom_call.1} parent=11 // pred_check
          %p216 = pneg %p91
        $region14: #{tpu_custom_call.1} parent=11 // pred_check_branch
          %218 = sbr.rel (%p216) target = $region16
        $region15: #{tpu_custom_call.1} parent=11 // pred_region
          _
        $region16: #{tpu_custom_call.1} parent=11 // pred_fallthru
          _
        // Predicated region
        $region17: #{tpu_custom_call.1} parent=11 // pred_check
          %p219 = pneg %p112
        $region18: #{tpu_custom_call.1} parent=11 // pred_check_branch
          %221 = sbr.rel (%p219) target = $region20
        $region19: #{tpu_custom_call.1} parent=11 // pred_region
          _
        $region20: #{tpu_custom_call.1} parent=11 // pred_fallthru
          _
        // Predicated region
        $region21: #{tpu_custom_call.1} parent=11 // pred_check
          %p222 = pneg %p133
        $region22: #{tpu_custom_call.1} parent=11 // pred_check_branch
          %224 = sbr.rel (%p222) target = $region24
        $region23: #{tpu_custom_call.1} parent=11 // pred_region
          _
        $region24: #{tpu_custom_call.1} parent=11 // pred_fallthru
          _
        // Predicated region
        $region25: #{tpu_custom_call.1} parent=11 // pred_check
          %p225 = pneg %p154
        $region26: #{tpu_custom_call.1} parent=11 // pred_check_branch
          %227 = sbr.rel (%p225) target = $region28
        $region27: #{tpu_custom_call.1} parent=11 // pred_region
          _
        $region28: #{tpu_custom_call.1} parent=11 // pred_fallthru
          _
        // Predicated region
        $region29: #{tpu_custom_call.1} parent=11 // pred_check
          %p228 = pneg %p175
        $region30: #{tpu_custom_call.1} parent=11 // pred_check_branch
          %230 = sbr.rel (%p228) target = $region32
        $region31: #{tpu_custom_call.1} parent=11 // pred_region
          _
        $region32: #{tpu_custom_call.1} parent=11 // pred_fallthru
          _
      $region12: #{tpu_custom_call.1} parent=5 // pred_fallthru
        _
      %p231 = scmp.lt.s32.totalorder %s18, 2
      // Predicated region
      $region33: #{tpu_custom_call.1} parent=5 // pred_check
        %p232 = pneg %p231
      $region34: #{tpu_custom_call.1} parent=5 // pred_check_branch
        %234 = sbr.rel (%p232) target = $region36
      $region35: #{tpu_custom_call.1} parent=5 // pred_region
        // Predicated region
        $region37: #{tpu_custom_call.1} parent=35 // pred_check
          %p235 = pneg %p38
        $region38: #{tpu_custom_call.1} parent=35 // pred_check_branch
          %237 = sbr.rel (%p235) target = $region40
        $region39: #{tpu_custom_call.1} parent=35 // pred_region
          %p238 = scmp.lt.s32.totalorder %s18, 1
          %s239 = scalar_select %p238, %s18, 1
          %s240 = smul.addr %s239, 8
          %s241 = scalar_lea.vmem %s0, %s240
        $region40: #{tpu_custom_call.1} parent=35 // pred_fallthru
          _
        // Predicated region
        $region41: #{tpu_custom_call.1} parent=35 // pred_check
          %p242 = pneg %p64
        $region42: #{tpu_custom_call.1} parent=35 // pred_check_branch
          %244 = sbr.rel (%p242) target = $region44
        $region43: #{tpu_custom_call.1} parent=35 // pred_region
          %s245 = smul.u32 8, %s18
          %p246 = scmp.lt.s32.totalorder %s245, 15
          %s247 = scalar_select %p246, %s245, 15
          %s248 = smul.addr %s247, 8
          %s249 = scalar_lea.vmem %s1, %s248
          %s250 = smul.u32 8, %s18
        $region44: #{tpu_custom_call.1} parent=35 // pred_fallthru
          _
      $region36: #{tpu_custom_call.1} parent=5 // pred_fallthru
        _
      %p251 = scmp.le.s32.totalorder 1, %s18
      %p252 = scmp.lt.s32.totalorder %s18, 3
      %p253 = pnand %p251, %p252
      %p254 = pneg %p253
      // Predicated region
      $region45: #{tpu_custom_call.1} parent=5 // pred_check
        _
      $region46: #{tpu_custom_call.1} parent=5 // pred_check_branch
        %256 = sbr.rel (%p253) target = $region48
      $region47: #{tpu_custom_call.1} parent=5 // pred_region
        %s257 = ssub.s32 %s18, 1
        %p258 = scmp.lt.s32.totalorder %s23, 1
        %s259 = scalar_select %p258, %s23, 1
        %s260 = smul.addr %s259, 8
        %s261 = scalar_lea.vmem %s0, %s260
        %p262 = pneg %p44
        %p263 = pneg %p41
        %s264 = smul.u32 8, %s23
        %p265 = scmp.lt.s32.totalorder %s264, 15
        %s266 = scalar_select %p265, %s264, 15
        %s267 = smul.addr %s266, 8
        %s268 = scalar_lea.vmem %s1, %s267
        %p269 = pneg %p70
        %p270 = pneg %p67
        %p271 = pneg %p91
        %p272 = pneg %p88
        %p273 = pneg %p112
        %p274 = pneg %p109
        %p275 = pneg %p133
        %p276 = pneg %p130
        %p277 = pneg %p154
        %p278 = pneg %p151
        %p279 = pneg %p175
        %p280 = pneg %p172
        %p281 = pneg %p201
        %p282 = pneg %p198
        %s283 = sand.u32 %s188, 1
        %s284 = scalar_lea.sflag [#allocation4], %s283
        %s285 = sand.u32 %s188, 1
        %s286 = smul.addr %s285, 8
        %s287 = scalar_lea.vmem [#allocation3], %s286
        %p288 = scmp.lt.s32.totalorder %s23, 1
        %s289 = scalar_select %p288, %s23, 1
        %s290 = smul.addr %s289, 8
        %s291 = scalar_lea.vmem %s0, %s290
        %s292 = smul.u32 8, %s23
        %p293 = scmp.lt.s32.totalorder %s292, 15
        %s294 = scalar_select %p293, %s292, 15
        %s295 = smul.addr %s294, 8
        %s296 = scalar_lea.vmem %s1, %s295
        %s297 = smul.u32 8, %s23
        %v298 = vld [vmem:[%s291] sm:$0xff]
        %v299 = vld [vmem:[%s296] sm:$0xff]
        %v300 = vld [vmem:[%s296 + $0x8] sm:$0xff]
        %v301 = vld [vmem:[%s296 + $0x10] sm:$0xff]
        %v302 = vld [vmem:[%s296 + $0x18] sm:$0xff]
        %v303 = vld [vmem:[%s296 + $0x20] sm:$0xff]
        %v304 = vld [vmem:[%s296 + $0x28] sm:$0xff]
        %v305 = vld [vmem:[%s296 + $0x30] sm:$0xff]
        %v306 = vld [vmem:[%s296 + $0x38] sm:$0xff]
        %v308 = vcombine.high %v298, %v298
        %v310 = vunpack.c.l.s4 1966171168
        %v311 = vunpack.c.0.s8 %v310
        %v312 = vlaneseq
        %v313 = vshrl.u32 %v312, 7
        %v314 = vsub.s32 %v311, %v313
        %v315 = vrot.slane %v298, %v314
        %v317 = vunpack.c.l.s4 1966171168
        %v318 = vunpack.c.0.s8 %v317
        %v319 = vlaneseq
        %v320 = vshrl.u32 %v319, 7
        %v321 = vsub.s32 %v318, %v320
        %v322 = vrot.slane %v308, %v321
        %v323 = vcombine.high %v315, %v315
        %v324 = vcombine.high %v322, %v322
        %v326 = vunpack.c.l.s4 1966171168
        %v327 = vunpack.c.0.s8 %v326
        %v328 = vlaneseq
        %v329 = vshrl.u32 %v328, 7
        %v330 = vsub.s32 %v327, %v329
        %v331 = vrot.slane %v315, %v330
        %v333 = vunpack.c.l.s4 1966171168
        %v334 = vunpack.c.0.s8 %v333
        %v335 = vlaneseq
        %v336 = vshrl.u32 %v335, 7
        %v337 = vsub.s32 %v334, %v336
        %v338 = vrot.slane %v322, %v337
        %v340 = vunpack.c.l.s4 1966171168
        %v341 = vunpack.c.0.s8 %v340
        %v342 = vlaneseq
        %v343 = vshrl.u32 %v342, 7
        %v344 = vsub.s32 %v341, %v343
        %v345 = vrot.slane %v323, %v344
        %v347 = vunpack.c.l.s4 1966171168
        %v348 = vunpack.c.0.s8 %v347
        %v349 = vlaneseq
        %v350 = vshrl.u32 %v349, 7
        %v351 = vsub.s32 %v348, %v350
        %v352 = vrot.slane %v324, %v351
        %v353 = vcombine.high %v331, %v331
        %v354 = vcombine.high %v338, %v338
        %v355 = vcombine.high %v345, %v345
        %v356 = vcombine.high %v352, %v352
        %v357 = vlaneseq
        %v358 = vshrl.u32 %v357, 7
        %v359 = vsub.s32 0, %v358
        %v360 = vrot.slane %v331, %v359
        %v361 = vlaneseq
        %v362 = vshrl.u32 %v361, 7
        %v363 = vsub.s32 0, %v362
        %v364 = vrot.slane %v345, %v363
        %v365 = vlaneseq
        %v366 = vshrl.u32 %v365, 7
        %v367 = vsub.s32 0, %v366
        %v368 = vrot.slane %v353, %v367
        %v369 = vlaneseq
        %v370 = vshrl.u32 %v369, 7
        %v371 = vsub.s32 0, %v370
        %v372 = vrot.slane %v355, %v371
        %v373 = vlaneseq
        %v374 = vshrl.u32 %v373, 7
        %v375 = vsub.s32 0, %v374
        %v376 = vrot.slane %v338, %v375
        %v377 = vlaneseq
        %v378 = vshrl.u32 %v377, 7
        %v379 = vsub.s32 0, %v378
        %v380 = vrot.slane %v352, %v379
        %v381 = vlaneseq
        %v382 = vshrl.u32 %v381, 7
        %v383 = vsub.s32 0, %v382
        %v384 = vrot.slane %v354, %v383
        %v385 = vlaneseq
        %v386 = vshrl.u32 %v385, 7
        %v387 = vsub.s32 0, %v386
        %v388 = vrot.slane %v356, %v387
        %v397 = vmul.f32 %v360, %v299
        %v398 = vmul.f32 %v364, %v300
        %v399 = vmul.f32 %v368, %v301
        %v400 = vmul.f32 %v372, %v302
        %v401 = vmul.f32 %v376, %v303
        %v402 = vmul.f32 %v380, %v304
        %v403 = vmul.f32 %v384, %v305
        %v404 = vmul.f32 %v388, %v306
        %413 = vrot.lane.b32.xlu0 %v397, 64
        %v414 = vpop.permute.xlu0 %413
        %415 = vrot.lane.b32.xlu0 %v398, 64
        %v416 = vpop.permute.xlu0 %415
        %417 = vrot.lane.b32.xlu0 %v399, 64
        %v418 = vpop.permute.xlu0 %417
        %419 = vrot.lane.b32.xlu0 %v400, 64
        %v420 = vpop.permute.xlu0 %419
        %421 = vrot.lane.b32.xlu0 %v401, 64
        %v422 = vpop.permute.xlu0 %421
        %423 = vrot.lane.b32.xlu0 %v402, 64
        %v424 = vpop.permute.xlu0 %423
        %425 = vrot.lane.b32.xlu0 %v403, 64
        %v426 = vpop.permute.xlu0 %425
        %427 = vrot.lane.b32.xlu0 %v404, 64
        %v428 = vpop.permute.xlu0 %427
        %vm437 = vcmask 523264
        %v438 = vsel %vm437, %v299, %v414
        %v439 = vsel %vm437, %v300, %v416
        %v440 = vsel %vm437, %v301, %v418
        %v441 = vsel %vm437, %v302, %v420
        %v442 = vsel %vm437, %v303, %v422
        %v443 = vsel %vm437, %v304, %v424
        %v444 = vsel %vm437, %v305, %v426
        %v445 = vsel %vm437, %v306, %v428
        %v446 = vld [vmem:[%s2] sm:$0xff]
        %v447 = vld [vmem:[%s2 + $0x8] sm:$0xff]
        %v448 = vld [vmem:[%s2 + $0x10] sm:$0xff]
        %v449 = vld [vmem:[%s2 + $0x18] sm:$0xff]
        %v450 = vld [vmem:[%s2 + $0x20] sm:$0xff]
        %v451 = vld [vmem:[%s2 + $0x28] sm:$0xff]
        %v452 = vld [vmem:[%s2 + $0x30] sm:$0xff]
        %v453 = vld [vmem:[%s2 + $0x38] sm:$0xff]
        %v454 = vsel %vm437, %v298, 0
        %456 = vmatprep.subr.mxu0 0.0
        %457 = vmatpush1.msra.mxu0 0.0
        %458 = vmatprep.subr.mxu0 0.0
        %459 = vmatpush1.msra.mxu0 0.0
        %460 = vmatprep.subr.mxu0 0.0
        %461 = vmatpush1.msra.mxu0 0.0
        %462 = vmatprep.subr.mxu0 0.0
        %463 = vmatpush1.msra.mxu0 0.0
        %464 = vmatprep.subr.mxu0 0.0
        %465 = vmatpush1.msra.mxu0 0.0
        %466 = vmatprep.subr.mxu0 0.0
        %467 = vmatpush1.msra.mxu0 0.0
        %468 = vmatprep.subr.mxu0 0.0
        %469 = vmatpush1.msra.mxu0 0.0
        %470 = vmatprep.subr.mxu0 0.0
        %471 = vmatpush1.msra.mxu0 0.0
        %472 = vmatprep.subr.mxu0 0.0
        %473 = vmatpush1.msra.mxu0 %v453
        %474 = vmatprep.subr.mxu0 0.0
        %475 = vmatpush1.msra.mxu0 %v452
        %476 = vmatprep.subr.mxu0 0.0
        %477 = vmatpush1.msra.mxu0 %v451
        %478 = vmatprep.subr.mxu0 0.0
        %479 = vmatpush1.msra.mxu0 %v450
        %480 = vmatprep.subr.mxu0 0.0
        %481 = vmatpush1.msra.mxu0 %v449
        %482 = vmatprep.subr.mxu0 0.0
        %483 = vmatpush1.msra.mxu0 %v448
        %484 = vmatprep.subr.mxu0 0.0
        %485 = vmatpush1.msra.mxu0 %v447
        %486 = vmatprep.subr.mxu0 0.0
        %487 = vmatpush1.msra.mxu0 %v446
        %488 = vmatprep.subr.mxu0 0.0
        %489 = vmatpush2.msra.mxu0 0.0
        %490 = vmatprep.subr.mxu0 0.0
        %491 = vmatpush2.msra.mxu0 0.0
        %492 = vmatprep.subr.mxu0 0.0
        %493 = vmatpush2.msra.mxu0 0.0
        %494 = vmatprep.subr.mxu0 0.0
        %495 = vmatpush2.msra.mxu0 0.0
        %496 = vmatprep.subr.mxu0 0.0
        %497 = vmatpush2.msra.mxu0 0.0
        %498 = vmatprep.subr.mxu0 0.0
        %499 = vmatpush2.msra.mxu0 0.0
        %500 = vmatprep.subr.mxu0 0.0
        %501 = vmatpush2.msra.mxu0 0.0
        %502 = vmatprep.subr.mxu0 0.0
        %503 = vmatpush2.msra.mxu0 0.0
        %504 = vmatprep.subr.mxu0 0.0
        %505 = vmatpush2.msra.mxu0 0.0
        %506 = vmatprep.subr.mxu0 0.0
        %507 = vmatpush2.msra.mxu0 0.0
        %508 = vmatprep.subr.mxu0 0.0
        %509 = vmatpush2.msra.mxu0 0.0
        %510 = vmatprep.subr.mxu0 0.0
        %511 = vmatpush2.msra.mxu0 0.0
        %512 = vmatprep.subr.mxu0 0.0
        %513 = vmatpush2.msra.mxu0 0.0
        %514 = vmatprep.subr.mxu0 0.0
        %515 = vmatpush2.msra.mxu0 0.0
        %516 = vmatprep.subr.mxu0 0.0
        %517 = vmatpush2.msra.mxu0 0.0
        %518 = vmatprep.subr.mxu0 0.0
        %519 = vmatpush2.msra.mxu0 0.0
        %520 = vmatprep.mubr.f32.mxu0 0.0
        %521 = vmatmul.mubr.f32.gmra.mxu0 %v454
        %v522 = vpop.f32.mrf.mxu0
        %v523 = vadd.f32 0.0, %v522
        %v524 = vpop.f32.mrf.mxu0
        %525 = vdwg.mxu0
        %v526 = vld [vmem:[%s3] sm:$0xff]
        %v527 = vld [vmem:[%s3 + $0x8] sm:$0xff]
        %v528 = vld [vmem:[%s3 + $0x10] sm:$0xff]
        %v529 = vld [vmem:[%s3 + $0x18] sm:$0xff]
        %v530 = vld [vmem:[%s3 + $0x20] sm:$0xff]
        %v531 = vld [vmem:[%s3 + $0x28] sm:$0xff]
        %v532 = vld [vmem:[%s3 + $0x30] sm:$0xff]
        %v533 = vld [vmem:[%s3 + $0x38] sm:$0xff]
        %v534 = vld [vmem:[%s3 + $0x40] sm:$0xff]
        %v535 = vld [vmem:[%s3 + $0x48] sm:$0xff]
        %v536 = vld [vmem:[%s3 + $0x50] sm:$0xff]
        %v537 = vld [vmem:[%s3 + $0x58] sm:$0xff]
        %v538 = vld [vmem:[%s3 + $0x60] sm:$0xff]
        %v539 = vld [vmem:[%s3 + $0x68] sm:$0xff]
        %v540 = vld [vmem:[%s3 + $0x70] sm:$0xff]
        %v541 = vld [vmem:[%s3 + $0x78] sm:$0xff]
        %542 = vmatprep.subr.mxu0 0.0
        %543 = vmatpush1.msra.mxu0 %v541
        %544 = vmatprep.subr.mxu0 0.0
        %545 = vmatpush1.msra.mxu0 %v540
        %546 = vmatprep.subr.mxu0 0.0
        %547 = vmatpush1.msra.mxu0 %v539
        %548 = vmatprep.subr.mxu0 0.0
        %549 = vmatpush1.msra.mxu0 %v538
        %550 = vmatprep.subr.mxu0 0.0
        %551 = vmatpush1.msra.mxu0 %v537
        %552 = vmatprep.subr.mxu0 0.0
        %553 = vmatpush1.msra.mxu0 %v536
        %554 = vmatprep.subr.mxu0 0.0
        %555 = vmatpush1.msra.mxu0 %v535
        %556 = vmatprep.subr.mxu0 0.0
        %557 = vmatpush1.msra.mxu0 %v534
        %558 = vmatprep.subr.mxu0 0.0
        %559 = vmatpush1.msra.mxu0 %v533
        %560 = vmatprep.subr.mxu0 0.0
        %561 = vmatpush1.msra.mxu0 %v532
        %562 = vmatprep.subr.mxu0 0.0
        %563 = vmatpush1.msra.mxu0 %v531
        %564 = vmatprep.subr.mxu0 0.0
        %565 = vmatpush1.msra.mxu0 %v530
        %566 = vmatprep.subr.mxu0 0.0
        %567 = vmatpush1.msra.mxu0 %v529
        %568 = vmatprep.subr.mxu0 0.0
        %569 = vmatpush1.msra.mxu0 %v528
        %570 = vmatprep.subr.mxu0 0.0
        %571 = vmatpush1.msra.mxu0 %v527
        %572 = vmatprep.subr.mxu0 0.0
        %573 = vmatpush1.msra.mxu0 %v526
        %574 = vmatprep.subr.mxu0 0.0
        %575 = vmatpush2.msra.mxu0 0.0
        %576 = vmatprep.subr.mxu0 0.0
        %577 = vmatpush2.msra.mxu0 0.0
        %578 = vmatprep.subr.mxu0 0.0
        %579 = vmatpush2.msra.mxu0 0.0
        %580 = vmatprep.subr.mxu0 0.0
        %581 = vmatpush2.msra.mxu0 0.0
        %582 = vmatprep.subr.mxu0 0.0
        %583 = vmatpush2.msra.mxu0 0.0
        %584 = vmatprep.subr.mxu0 0.0
        %585 = vmatpush2.msra.mxu0 0.0
        %586 = vmatprep.subr.mxu0 0.0
        %587 = vmatpush2.msra.mxu0 0.0
        %588 = vmatprep.subr.mxu0 0.0
        %589 = vmatpush2.msra.mxu0 0.0
        %590 = vmatprep.subr.mxu0 0.0
        %591 = vmatpush2.msra.mxu0 0.0
        %592 = vmatprep.subr.mxu0 0.0
        %593 = vmatpush2.msra.mxu0 0.0
        %594 = vmatprep.subr.mxu0 0.0
        %595 = vmatpush2.msra.mxu0 0.0
        %596 = vmatprep.subr.mxu0 0.0
        %597 = vmatpush2.msra.mxu0 0.0
        %598 = vmatprep.subr.mxu0 0.0
        %599 = vmatpush2.msra.mxu0 0.0
        %600 = vmatprep.subr.mxu0 0.0
        %601 = vmatpush2.msra.mxu0 0.0
        %602 = vmatprep.subr.mxu0 0.0
        %603 = vmatpush2.msra.mxu0 0.0
        %604 = vmatprep.subr.mxu0 0.0
        %605 = vmatpush2.msra.mxu0 0.0
        %606 = vmatprep.mubr.f32.mxu0 0.0
        %607 = vmatmul.mubr.f32.gmra.mxu0 %v438
        %v608 = vpop.f32.mrf.mxu0
        %v609 = vadd.f32 0.0, %v608
        %v610 = vpop.f32.mrf.mxu0
        %611 = vmatprep.mubr.f32.mxu0 0.0
        %612 = vmatmul.mubr.f32.gmra.mxu0 %v439
        %v613 = vpop.f32.mrf.mxu0
        %v614 = vadd.f32 0.0, %v613
        %v615 = vpop.f32.mrf.mxu0
        %616 = vmatprep.mubr.f32.mxu0 0.0
        %617 = vmatmul.mubr.f32.gmra.mxu0 %v440
        %v618 = vpop.f32.mrf.mxu0
        %v619 = vadd.f32 0.0, %v618
        %v620 = vpop.f32.mrf.mxu0
        %621 = vmatprep.mubr.f32.mxu0 0.0
        %622 = vmatmul.mubr.f32.gmra.mxu0 %v441
        %v623 = vpop.f32.mrf.mxu0
        %v624 = vadd.f32 0.0, %v623
        %v625 = vpop.f32.mrf.mxu0
        %626 = vmatprep.mubr.f32.mxu0 0.0
        %627 = vmatmul.mubr.f32.gmra.mxu0 %v442
        %v628 = vpop.f32.mrf.mxu0
        %v629 = vadd.f32 0.0, %v628
        %v630 = vpop.f32.mrf.mxu0
        %631 = vmatprep.mubr.f32.mxu0 0.0
        %632 = vmatmul.mubr.f32.gmra.mxu0 %v443
        %v633 = vpop.f32.mrf.mxu0
        %v634 = vadd.f32 0.0, %v633
        %v635 = vpop.f32.mrf.mxu0
        %636 = vmatprep.mubr.f32.mxu0 0.0
        %637 = vmatmul.mubr.f32.gmra.mxu0 %v444
        %v638 = vpop.f32.mrf.mxu0
        %v639 = vadd.f32 0.0, %v638
        %v640 = vpop.f32.mrf.mxu0
        %641 = vmatprep.mubr.f32.mxu0 0.0
        %642 = vmatmul.mubr.f32.gmra.mxu0 %v445
        %v643 = vpop.f32.mrf.mxu0
        %v644 = vadd.f32 0.0, %v643
        %v645 = vpop.f32.mrf.mxu0
        %646 = vdwg.mxu0
        %v648 = vcombine.high %v523, %v523
        %v650 = vunpack.c.l.s4 1966171168
        %v651 = vunpack.c.0.s8 %v650
        %v652 = vlaneseq
        %v653 = vshrl.u32 %v652, 7
        %v654 = vsub.s32 %v651, %v653
        %v655 = vrot.slane %v523, %v654
        %v657 = vunpack.c.l.s4 1966171168
        %v658 = vunpack.c.0.s8 %v657
        %v659 = vlaneseq
        %v660 = vshrl.u32 %v659, 7
        %v661 = vsub.s32 %v658, %v660
        %v662 = vrot.slane %v648, %v661
        %v663 = vcombine.high %v655, %v655
        %v664 = vcombine.high %v662, %v662
        %v666 = vunpack.c.l.s4 1966171168
        %v667 = vunpack.c.0.s8 %v666
        %v668 = vlaneseq
        %v669 = vshrl.u32 %v668, 7
        %v670 = vsub.s32 %v667, %v669
        %v671 = vrot.slane %v655, %v670
        %v673 = vunpack.c.l.s4 1966171168
        %v674 = vunpack.c.0.s8 %v673
        %v675 = vlaneseq
        %v676 = vshrl.u32 %v675, 7
        %v677 = vsub.s32 %v674, %v676
        %v678 = vrot.slane %v662, %v677
        %v680 = vunpack.c.l.s4 1966171168
        %v681 = vunpack.c.0.s8 %v680
        %v682 = vlaneseq
        %v683 = vshrl.u32 %v682, 7
        %v684 = vsub.s32 %v681, %v683
        %v685 = vrot.slane %v663, %v684
        %v687 = vunpack.c.l.s4 1966171168
        %v688 = vunpack.c.0.s8 %v687
        %v689 = vlaneseq
        %v690 = vshrl.u32 %v689, 7
        %v691 = vsub.s32 %v688, %v690
        %v692 = vrot.slane %v664, %v691
        %v693 = vcombine.high %v671, %v671
        %v694 = vcombine.high %v678, %v678
        %v695 = vcombine.high %v685, %v685
        %v696 = vcombine.high %v692, %v692
        %v697 = vlaneseq
        %v698 = vshrl.u32 %v697, 7
        %v699 = vsub.s32 0, %v698
        %v700 = vrot.slane %v671, %v699
        %v701 = vlaneseq
        %v702 = vshrl.u32 %v701, 7
        %v703 = vsub.s32 0, %v702
        %v704 = vrot.slane %v685, %v703
        %v705 = vlaneseq
        %v706 = vshrl.u32 %v705, 7
        %v707 = vsub.s32 0, %v706
        %v708 = vrot.slane %v693, %v707
        %v709 = vlaneseq
        %v710 = vshrl.u32 %v709, 7
        %v711 = vsub.s32 0, %v710
        %v712 = vrot.slane %v695, %v711
        %v713 = vlaneseq
        %v714 = vshrl.u32 %v713, 7
        %v715 = vsub.s32 0, %v714
        %v716 = vrot.slane %v678, %v715
        %v717 = vlaneseq
        %v718 = vshrl.u32 %v717, 7
        %v719 = vsub.s32 0, %v718
        %v720 = vrot.slane %v692, %v719
        %v721 = vlaneseq
        %v722 = vshrl.u32 %v721, 7
        %v723 = vsub.s32 0, %v722
        %v724 = vrot.slane %v694, %v723
        %v725 = vlaneseq
        %v726 = vshrl.u32 %v725, 7
        %v727 = vsub.s32 0, %v726
        %v728 = vrot.slane %v696, %v727
        %v737 = vadd.f32 %v609, %v700
        %v738 = vadd.f32 %v614, %v704
        %v739 = vadd.f32 %v619, %v708
        %v740 = vadd.f32 %v624, %v712
        %v741 = vadd.f32 %v629, %v716
        %v742 = vadd.f32 %v634, %v720
        %v743 = vadd.f32 %v639, %v724
        %v744 = vadd.f32 %v644, %v728
        %v745 = vld [vmem:[%s4] sm:$0x1]
        %v747 = vlaneseq
        %v748 = vshrl.u32 %v747, 7
        %v749 = vsub.s32 0, %v748
        %v750 = vrot.slane %v745, %v749
        %v752 = vadd.f32 %v737, %v750
        %v753 = vadd.f32 %v738, %v750
        %v754 = vadd.f32 %v739, %v750
        %v755 = vadd.f32 %v740, %v750
        %v756 = vadd.f32 %v741, %v750
        %v757 = vadd.f32 %v742, %v750
        %v758 = vadd.f32 %v743, %v750
        %v759 = vadd.f32 %v744, %v750
        %v760 = vmax.f32 %v752, 0.0
        %v761 = vmax.f32 %v753, 0.0
        %v762 = vmax.f32 %v754, 0.0
        %v763 = vmax.f32 %v755, 0.0
        %v764 = vmax.f32 %v756, 0.0
        %v765 = vmax.f32 %v757, 0.0
        %v766 = vmax.f32 %v758, 0.0
        %v767 = vmax.f32 %v759, 0.0
        %v768 = vld [vmem:[%s5] sm:$0x1]
        %v770 = vlaneseq
        %v771 = vshrl.u32 %v770, 7
        %v772 = vsub.s32 0, %v771
        %v773 = vrot.slane %v768, %v772
        %v775 = vmul.f32 %v760, %v773
        %v776 = vmul.f32 %v761, %v773
        %v777 = vmul.f32 %v762, %v773
        %v778 = vmul.f32 %v763, %v773
        %v779 = vmul.f32 %v764, %v773
        %v780 = vmul.f32 %v765, %v773
        %v781 = vmul.f32 %v766, %v773
        %v782 = vmul.f32 %v767, %v773
        %vm783 = vcmask 261120
        %v784 = vsel %vm783, %v775, 0.0
        %785 = vadd.xlane.f32.xlu0 %v784
        %v786 = vpop.xlane.xlu0 %785
        %v787 = vsel %vm783, %v776, 0.0
        %788 = vadd.xlane.f32.xlu0 %v787
        %v789 = vpop.xlane.xlu0 %788
        %v790 = vsel %vm783, %v777, 0.0
        %791 = vadd.xlane.f32.xlu0 %v790
        %v792 = vpop.xlane.xlu0 %791
        %v793 = vsel %vm783, %v778, 0.0
        %794 = vadd.xlane.f32.xlu0 %v793
        %v795 = vpop.xlane.xlu0 %794
        %v796 = vsel %vm783, %v779, 0.0
        %797 = vadd.xlane.f32.xlu0 %v796
        %v798 = vpop.xlane.xlu0 %797
        %v799 = vsel %vm783, %v780, 0.0
        %800 = vadd.xlane.f32.xlu0 %v799
        %v801 = vpop.xlane.xlu0 %800
        %v802 = vsel %vm783, %v781, 0.0
        %803 = vadd.xlane.f32.xlu0 %v802
        %v804 = vpop.xlane.xlu0 %803
        %v805 = vsel %vm783, %v782, 0.0
        %806 = vadd.xlane.f32.xlu0 %v805
        %v807 = vpop.xlane.xlu0 %806
        %v808 = vld [vmem:[#allocation2] sm:$0x1]
        %v810 = vlaneseq
        %v811 = vshrl.u32 %v810, 7
        %v812 = vsub.s32 0, %v811
        %v813 = vrot.slane %v808, %v812
        %v815 = vadd.f32 %v786, %v813
        %v816 = vadd.f32 %v789, %v813
        %v817 = vadd.f32 %v792, %v813
        %v818 = vadd.f32 %v795, %v813
        %v819 = vadd.f32 %v798, %v813
        %v820 = vadd.f32 %v801, %v813
        %v821 = vadd.f32 %v804, %v813
        %v822 = vadd.f32 %v807, %v813
        %824 = vset.pattern.permute.xlu0 0
        %825 = vperm.xlu0 %824, %v815
        %v826 = vpop.permute.xlu0 %825
        %829 = vset.pattern.permute.xlu0 0
        %830 = vperm.xlu0 %829, %v816
        %v831 = vpop.permute.xlu0 %830
        %834 = vset.pattern.permute.xlu0 0
        %835 = vperm.xlu0 %834, %v817
        %v836 = vpop.permute.xlu0 %835
        %839 = vset.pattern.permute.xlu0 0
        %840 = vperm.xlu0 %839, %v818
        %v841 = vpop.permute.xlu0 %840
        %844 = vset.pattern.permute.xlu0 0
        %845 = vperm.xlu0 %844, %v819
        %v846 = vpop.permute.xlu0 %845
        %849 = vset.pattern.permute.xlu0 0
        %850 = vperm.xlu0 %849, %v820
        %v851 = vpop.permute.xlu0 %850
        %854 = vset.pattern.permute.xlu0 0
        %855 = vperm.xlu0 %854, %v821
        %v856 = vpop.permute.xlu0 %855
        %859 = vset.pattern.permute.xlu0 0
        %860 = vperm.xlu0 %859, %v822
        %v861 = vpop.permute.xlu0 %860
        %v863 = vmul.f32 %v826, %v299
        %v864 = vmul.f32 %v831, %v300
        %v865 = vmul.f32 %v836, %v301
        %v866 = vmul.f32 %v841, %v302
        %v867 = vmul.f32 %v846, %v303
        %v868 = vmul.f32 %v851, %v304
        %v869 = vmul.f32 %v856, %v305
        %v870 = vmul.f32 %v861, %v306
        %v871 = vsel %vm437, %v863, 0.0
        %v872 = vrot.slane %v871, 4
        %v873 = vadd.f32 %v871, %v872
        %v874 = vrot.slane %v873, 2
        %v875 = vadd.f32 %v873, %v874
        %v876 = vrot.slane %v875, 1
        %v877 = vadd.f32 %v875, %v876
        %v878 = vsel %vm437, %v864, 0.0
        %v879 = vrot.slane %v878, 4
        %v880 = vadd.f32 %v878, %v879
        %v881 = vrot.slane %v880, 2
        %v882 = vadd.f32 %v880, %v881
        %v883 = vrot.slane %v882, 1
        %v884 = vadd.f32 %v882, %v883
        %v885 = vsel %vm437, %v865, 0.0
        %v886 = vrot.slane %v885, 4
        %v887 = vadd.f32 %v885, %v886
        %v888 = vrot.slane %v887, 2
        %v889 = vadd.f32 %v887, %v888
        %v890 = vrot.slane %v889, 1
        %v891 = vadd.f32 %v889, %v890
        %v892 = vsel %vm437, %v866, 0.0
        %v893 = vrot.slane %v892, 4
        %v894 = vadd.f32 %v892, %v893
        %v895 = vrot.slane %v894, 2
        %v896 = vadd.f32 %v894, %v895
        %v897 = vrot.slane %v896, 1
        %v898 = vadd.f32 %v896, %v897
        %v899 = vsel %vm437, %v867, 0.0
        %v900 = vrot.slane %v899, 4
        %v901 = vadd.f32 %v899, %v900
        %v902 = vrot.slane %v901, 2
        %v903 = vadd.f32 %v901, %v902
        %v904 = vrot.slane %v903, 1
        %v905 = vadd.f32 %v903, %v904
        %v906 = vsel %vm437, %v868, 0.0
        %v907 = vrot.slane %v906, 4
        %v908 = vadd.f32 %v906, %v907
        %v909 = vrot.slane %v908, 2
        %v910 = vadd.f32 %v908, %v909
        %v911 = vrot.slane %v910, 1
        %v912 = vadd.f32 %v910, %v911
        %v913 = vsel %vm437, %v869, 0.0
        %v914 = vrot.slane %v913, 4
        %v915 = vadd.f32 %v913, %v914
        %v916 = vrot.slane %v915, 2
        %v917 = vadd.f32 %v915, %v916
        %v918 = vrot.slane %v917, 1
        %v919 = vadd.f32 %v917, %v918
        %v920 = vsel %vm437, %v870, 0.0
        %v921 = vrot.slane %v920, 4
        %v922 = vadd.f32 %v920, %v921
        %v923 = vrot.slane %v922, 2
        %v924 = vadd.f32 %v922, %v923
        %v925 = vrot.slane %v924, 1
        %v926 = vadd.f32 %v924, %v925
        %vm935 = vcmask 1041409
        %v936 = vsel %vm935, %v884, %v877
        %vm937 = vcmask 1042434
        %v938 = vsel %vm937, %v891, %v936
        %vm939 = vcmask 1043459
        %v940 = vsel %vm939, %v898, %v938
        %vm941 = vcmask 1044484
        %v942 = vsel %vm941, %v905, %v940
        %vm943 = vcmask 1045509
        %v944 = vsel %vm943, %v912, %v942
        %vm945 = vcmask 1046534
        %v946 = vsel %vm945, %v919, %v944
        %vm947 = vcmask 1047559
        %v948 = vsel %vm947, %v926, %v946
        %950 = vst.msk [vmem:[%s287] sm:$0xff] %vm437, %v948
        %s951 = sand.u32 %s188, 1
        %s952 = scalar_lea.sflag [#allocation4], %s951
        %s953 = sand.u32 %s188, 1
        %s954 = smul.addr %s953, 8
        %s955 = scalar_lea.vmem [#allocation3], %s954
        // Predicated region
        $region49: #{tpu_custom_call.1} parent=47 // pred_check
          %p956 = pneg %p198
        $region50: #{tpu_custom_call.1} parent=47 // pred_check_branch
          %958 = sbr.rel (%p956) target = $region52
        $region51: #{tpu_custom_call.1} parent=47 // pred_region
          %s960 = ssub.s32 128, 128
          %961 = vsyncadd %s952, %s960
          %s962 = smul.addr %s23, 128
          %s963 = scalar_lea.hbm %s7, %s962
          %s965 = sshll.u32 %s955, 4
          %s966 = int_to_ptr.vmem [resolvable:$true] %s965
          %968 = dma.vmem_to_hbm [thread:$0]  %s966, 128, %s963, %s952
        $region52: #{tpu_custom_call.1} parent=47 // pred_fallthru
          _
      $region48: #{tpu_custom_call.1} parent=5 // pred_fallthru
        _
      %p969 = scmp.le.s32.totalorder 2, %s18
      // Predicated region
      $region53: #{tpu_custom_call.1} parent=5 // pred_check
        %p970 = pneg %p969
      $region54: #{tpu_custom_call.1} parent=5 // pred_check_branch
        %972 = sbr.rel (%p970) target = $region56
      $region55: #{tpu_custom_call.1} parent=5 // pred_region
        %s973 = ssub.s32 %s18, 2
        // Predicated region
        $region57: #{tpu_custom_call.1} parent=55 // pred_check
          %p974 = pneg %p204
        $region58: #{tpu_custom_call.1} parent=55 // pred_check_branch
          %976 = sbr.rel (%p974) target = $region60
        $region59: #{tpu_custom_call.1} parent=55 // pred_region
          %s977 = sand.u32 %s189, 1
          %s978 = scalar_lea.sflag [#allocation4], %s977
          %s979 = sand.u32 %s189, 1
          %s980 = smul.addr %s979, 8
          %s981 = scalar_lea.vmem [#allocation3], %s980
          %982 = dma.done %s978, 128
        $region60: #{tpu_custom_call.1} parent=55 // pred_fallthru
          _
      $region56: #{tpu_custom_call.1} parent=5 // pred_fallthru
        _
    $region6: #{tpu_custom_call.1} parent=1 // loop_footer
      %s22 = sadd.s32 1, %s18
    $region7: #{tpu_custom_call.1} parent=1 // loop_footer_branch
      %17 = sbr.rel target = $region3
    $region8: #{tpu_custom_call.1} parent=1 // loop_exit
      _
    %983 = vsyncpa [#allocation4], 1
    %s984 = scalar_lea.sflag [#allocation4], 1
    %985 = vsyncpa %s984, 1

</llo_original>
